<compile_context>
chip_gen: v7x
topology: tpu7x:2x2x1
jax: 0.10.0
libtpu: 0.0.40
codegen_flags: <defaults>
</compile_context>

<pallas_src>
import functools

import jax
import jax.numpy as jnp
from jax.experimental import pallas as pl
from jax.experimental.pallas import tpu as pltpu


def _round_up(x, m):
    return ((x + m - 1) // m) * m


def poly_linear_kernel(x_ref, w_ref, b_ref, o_ref):
    # x_ref: (3, TILE_N) VMEM   w_ref: (3,) SMEM   b_ref: (1,) SMEM
    # o_ref: (1, TILE_N) VMEM
    x = x_ref[...].astype(jnp.float32)  # f32 compute path (safe on v5e)
    w0 = w_ref[0]
    w1 = w_ref[1]
    w2 = w_ref[2]
    b = b_ref[0]
    # out[0, n] = x[0, n]*w0 + x[1, n]*w1 + x[2, n]*w2 + b   (pure VPU MACs)
    out = x[0:1, :] * w0 + x[1:2, :] * w1 + x[2:3, :] * w2 + b
    o_ref[...] = out.astype(o_ref.dtype)


@functools.partial(jax.jit, static_argnames=("tile_n",))
def poly_net_forward(x, weight, bias, *, tile_n=1024):
    """Pallas equivalent of PolyNet.forward: out = x @ weight.T + bias."""
    n, k = x.shape
    assert k == 3
    assert weight.shape == (1, 3)
    assert bias.shape == (1,)

    # Lane-dense layout: batch on the lane axis.  Tile is a multiple of 128,
    # clamped so tiny batches use a single 128-lane tile.  Padding lanes are
    # zero and get sliced off below.
    tile_n = max(128, _round_up(tile_n, 128))
    tile_n = min(tile_n, _round_up(n, 128))
    n_pad = _round_up(n, tile_n)
    xt = jnp.zeros((3, n_pad), x.dtype).at[:, :n].set(x.T)

    w_smem = weight.reshape(3).astype(jnp.float32)
    b_smem = bias.reshape(1).astype(jnp.float32)

    grid = (n_pad // tile_n,)
    out_t = pl.pallas_call(
        poly_linear_kernel,
        out_shape=jax.ShapeDtypeStruct((1, n_pad), x.dtype),
        grid=grid,
        in_specs=[
            pl.BlockSpec((3, tile_n), lambda i: (0, i)),
            pl.BlockSpec(memory_space=pltpu.MemorySpace.SMEM),
            pl.BlockSpec(memory_space=pltpu.MemorySpace.SMEM),
        ],
        out_specs=pl.BlockSpec((1, tile_n), lambda i: (0, i)),
        compiler_params=pltpu.CompilerParams(
            dimension_semantics=("parallel",)),
    )(xt, w_smem, b_smem)

    # Back to PyTorch's (N, 1) layout.
    return out_t[0, :n].reshape(n, 1)


if __name__ == "__main__":
    key = jax.random.PRNGKey(0)
    kx, kw, kb = jax.random.split(key, 3)

    # Small input consistent with nn.Linear(3, 1): batch=8, features=3.
    x = jax.random.normal(kx, (8, 3), dtype=jnp.float32)

    # Deterministic parameter init (PyTorch Linear uses U(-1/sqrt(3), 1/sqrt(3))).
    bound = 1.0 / jnp.sqrt(3.0)
    weight = jax.random.uniform(kw, (1, 3), minval=-bound, maxval=bound,
                                dtype=jnp.float32)
    bias = jax.random.uniform(kb, (1,), minval=-bound, maxval=bound,
                              dtype=jnp.float32)

    out = poly_net_forward(x, weight, bias)
    out = jax.block_until_ready(out)

    ref = x @ weight.T + bias
    assert out.shape == (8, 1)
    assert jnp.allclose(out, ref, atol=1e-5, rtol=1e-5)

    # Also exercise the tiled / padded path (grid > 1, ragged final tile).
    x_big = jax.random.normal(kx, (2000, 3), dtype=jnp.float32)
    out_big = jax.block_until_ready(poly_net_forward(x_big, weight, bias))
    ref_big = x_big @ weight.T + bias
    assert out_big.shape == (2000, 1)
    assert jnp.allclose(out_big, ref_big, atol=1e-5, rtol=1e-5)

    print("KERNEL_OK")
</pallas_src>

<mosaic_0001>
module attributes {stable_mosaic.version = 11 : i64} {
  func.func @poly_linear_kernel(%arg0: i32, %arg1: memref<3x128xf32, #tpu.memory_space<vmem>>, %arg2: memref<3xf32, #tpu.memory_space<smem>>, %arg3: memref<1xf32, #tpu.memory_space<smem>>, %arg4: memref<1x128xf32, #tpu.memory_space<vmem>>) attributes {dimension_semantics = [#tpu.dimension_semantics<parallel>], iteration_bounds = array<i64: 1>, scalar_prefetch = 0 : i64, scratch_operands = 0 : i64, tpu.core_type = #tpu.core_type<tc>, window_params = [{transform_indices = @transform_0, window_bounds = array<i64: 3, 128>}, {transform_indices = @transform_1, window_bounds = array<i64: 3>}, {transform_indices = @transform_2, window_bounds = array<i64: 1>}, {transform_indices = @transform_3, window_bounds = array<i64: 1, 128>}]} {
    %c0 = arith.constant 0 : index
    %c0_0 = arith.constant 0 : index
    %0 = vector.load %arg1[%c0, %c0_0] : memref<3x128xf32, #tpu.memory_space<vmem>>, vector<3x128xf32>
    %c0_1 = arith.constant 0 : index
    %1 = memref.load %arg2[%c0_1] : memref<3xf32, #tpu.memory_space<smem>>
    %c1 = arith.constant 1 : index
    %2 = memref.load %arg2[%c1] : memref<3xf32, #tpu.memory_space<smem>>
    %c2 = arith.constant 2 : index
    %3 = memref.load %arg2[%c2] : memref<3xf32, #tpu.memory_space<smem>>
    %c0_2 = arith.constant 0 : index
    %4 = memref.load %arg3[%c0_2] : memref<1xf32, #tpu.memory_space<smem>>
    %5 = vector.extract_strided_slice %0 {offsets = [0, 0], sizes = [1, 128], strides = [1, 1]} : vector<3x128xf32> to vector<1x128xf32>
    %6 = vector.broadcast %1 : f32 to vector<1x128xf32>
    %7 = arith.mulf %5, %6 : vector<1x128xf32>
    %8 = vector.extract_strided_slice %0 {offsets = [1, 0], sizes = [1, 128], strides = [1, 1]} : vector<3x128xf32> to vector<1x128xf32>
    %9 = vector.broadcast %2 : f32 to vector<1x128xf32>
    %10 = arith.mulf %8, %9 : vector<1x128xf32>
    %11 = arith.addf %7, %10 : vector<1x128xf32>
    %12 = vector.extract_strided_slice %0 {offsets = [2, 0], sizes = [1, 128], strides = [1, 1]} : vector<3x128xf32> to vector<1x128xf32>
    %13 = vector.broadcast %3 : f32 to vector<1x128xf32>
    %14 = arith.mulf %12, %13 : vector<1x128xf32>
    %15 = arith.addf %11, %14 : vector<1x128xf32>
    %16 = vector.broadcast %4 : f32 to vector<1x128xf32>
    %17 = arith.addf %15, %16 : vector<1x128xf32>
    %c0_3 = arith.constant 0 : index
    %c0_4 = arith.constant 0 : index
    %18 = vector.load %arg4[%c0_3, %c0_4] : memref<1x128xf32, #tpu.memory_space<vmem>>, vector<1x128xf32>
    tpu.vector_store %arg4[%c0_3, %c0_4], %17 {strides = array<i32>} : memref<1x128xf32, #tpu.memory_space<vmem>>, vector<1x128xf32>,
    return
  }
  func.func @transform_0(%arg0: i32) -> (i32, i32) {
    %c0_i32 = arith.constant 0 : i32
    %c0_i32_0 = arith.constant 0 : i32
    return %c0_i32, %arg0 : i32, i32
  }
  func.func @transform_1(%arg0: i32) -> i32 {
    %c0_i32 = arith.constant 0 : i32
    %c0_i32_0 = arith.constant 0 : i32
    return %c0_i32 : i32
  }
  func.func @transform_2(%arg0: i32) -> i32 {
    %c0_i32 = arith.constant 0 : i32
    %c0_i32_0 = arith.constant 0 : i32
    return %c0_i32 : i32
  }
  func.func @transform_3(%arg0: i32) -> (i32, i32) {
    %c0_i32 = arith.constant 0 : i32
    %c0_i32_0 = arith.constant 0 : i32
    return %c0_i32, %arg0 : i32, i32
  }
}

</mosaic_0001>

<llo_original>
// kernel: poly_net_forward.1
$region0: #{poly_net_forward.1}
  #allocation0 [shape = 'u32[]', space=smem, size = 0x4, offset = 0x4, fixed_abs, tag = 'smem constant byte address 0x4 - core index']
  #allocation1 [shape = 'u32[144,128]{1,0:T(1,128)}', space=vmem, size = 0x12000, scoped, tag = 'internal scratch']
  #allocation2 [shape = 'f32[1]{0:T(128)S(6)}', space=smem, size = 0x200, scoped, tag = 'scoped memory for poly_net_forward.1']
  %s0 = inlined_call_operand.vmem [shape: f32[3,128], index: 0, kind: input, shape index: {}]
  %s1 = inlined_call_operand.vmem [shape: f32[3], index: 1, kind: input, shape index: {}]
  %s2 = inlined_call_operand.<no memory space> [shape: f32[1], index: 2, kind: input, shape index: {}]
  %s3 = inlined_call_operand.vmem [shape: f32[1,128], index: 3, kind: output, shape index: {}]
  %s4 = sld [smem:[#allocation0]]
  $region26: #{poly_net_forward.1} parent=0
    _
  %s6 = ssub.s32 1, %s4
  %s7 = scalar_select 0, %s6, %s4
  %8 = sst [smem:[#allocation2]] %s2
  $region1: #{poly_net_forward.1} parent=0
    #allocation3 [shape = 'u8[512]{0}', space=smem, size = 0x200, scoped, tag = 'input window, operand 1, single buffered']
    #allocation4 [shape = 's32[1]{0}', space=sflag, size = 0x4, scoped, tag = 'scoped memory for poly_net_forward.1']
    %9 = vsyncpa [#allocation4], 0
    // Predicated region
    $region2: #{poly_net_forward.1} parent=1 // pred_check
      _
    $region3: #{poly_net_forward.1} parent=1 // pred_check_branch
      %11 = sbr.rel (0) target = $region5
    $region4: #{poly_net_forward.1} parent=1 // pred_region
      _
    $region5: #{poly_net_forward.1} parent=1 // pred_fallthru
      _
    // Predicated region
    $region6: #{poly_net_forward.1} parent=1 // pred_check
      _
    $region7: #{poly_net_forward.1} parent=1 // pred_check_branch
      %13 = sbr.rel (0) target = $region9
    $region8: #{poly_net_forward.1} parent=1 // pred_region
      %s15 = ssub.s32 16, 16
      %16 = vsyncadd [#allocation4], %s15
      %s18 = sshll.u32 %s1, 4
      %s19 = int_to_ptr.vmem [resolvable:$true] %s18
      %21 = dma.vmem_to_smem %s19, 16, [#allocation3], [#allocation4]
    $region9: #{poly_net_forward.1} parent=1 // pred_fallthru
      _
    // Predicated region
    $region10: #{poly_net_forward.1} parent=1 // pred_check
      _
    $region11: #{poly_net_forward.1} parent=1 // pred_check_branch
      %23 = sbr.rel (0) target = $region13
    $region12: #{poly_net_forward.1} parent=1 // pred_region
      _
    $region13: #{poly_net_forward.1} parent=1 // pred_fallthru
      _
    // Predicated region
    $region14: #{poly_net_forward.1} parent=1 // pred_check
      _
    $region15: #{poly_net_forward.1} parent=1 // pred_check_branch
      %25 = sbr.rel (0) target = $region17
    $region16: #{poly_net_forward.1} parent=1 // pred_region
      %26 = dma.done [#allocation4], 16
    $region17: #{poly_net_forward.1} parent=1 // pred_fallthru
      _
    %27 = sfence
    %v28 = vld [vmem:[%s0] sm:$0x7]
    %s29 = sld [smem:[#allocation3]]
    %s30 = sld [smem:[#allocation3 + $0x1]]
    %s31 = sld [smem:[#allocation3 + $0x2]]
    %s32 = sld [smem:[#allocation2]]
    %v33 = vstv %s29
    %v34 = vmul.f32 %v28, %v33
    %v35 = vstv %s30
    %v36 = vmul.f32 %v28, %v35
    %v38 = vrot.slane %v36, 1
    %v40 = vadd.f32 %v34, %v38
    %v41 = vstv %s31
    %v42 = vmul.f32 %v28, %v41
    %v44 = vrot.slane %v42, 2
    %v46 = vadd.f32 %v40, %v44
    %v47 = vstv %s32
    %v48 = vadd.f32 %v46, %v47
    %49 = vst [vmem:[%s3] sm:$0x1] %v48
    // Predicated region
    $region18: #{poly_net_forward.1} parent=1 // pred_check
      _
    $region19: #{poly_net_forward.1} parent=1 // pred_check_branch
      %51 = sbr.rel (0) target = $region21
    $region20: #{poly_net_forward.1} parent=1 // pred_region
      _
    $region21: #{poly_net_forward.1} parent=1 // pred_fallthru
      _
    // Predicated region
    $region22: #{poly_net_forward.1} parent=1 // pred_check
      _
    $region23: #{poly_net_forward.1} parent=1 // pred_check_branch
      %53 = sbr.rel (0) target = $region25
    $region24: #{poly_net_forward.1} parent=1 // pred_region
      _
    $region25: #{poly_net_forward.1} parent=1 // pred_fallthru
      _
    %54 = vsyncpa [#allocation4], 1

</llo_original>
